<compile_context>
chip_gen: v7x
topology: tpu7x:2x2x1
jax: 0.10.0
libtpu: 0.0.40
codegen_flags: <defaults>
</compile_context>

<pallas_src>
import functools

import jax
import jax.numpy as jnp
from jax import lax
from jax.experimental import pallas as pl
from jax.experimental.pallas import tpu as pltpu


# ---------------------------------------------------------------------------
# Tile selection for the H*W (contraction) axis
# ---------------------------------------------------------------------------
def _pick_tk(hw, max_tk=2048):
    """Largest legal contraction tile: full HW if small enough, otherwise the
    biggest multiple of 128 that evenly divides HW (falls back to full HW so
    correctness never depends on divisibility)."""
    if hw <= max_tk:
        return hw
    tk = (max_tk // 128) * 128
    while tk >= 128:
        if hw % tk == 0:
            return tk
        tk -= 128
    return hw


_COMPILER_PARAMS = pltpu.CompilerParams(
    dimension_semantics=("arbitrary",),          # reduction over H*W tiles
    vmem_limit_bytes=32 * 1024 * 1024,           # safe on v5e/v6e/v7x
)


# ---------------------------------------------------------------------------
# Kernels
# ---------------------------------------------------------------------------
def _gram_kernel(f_ref, g_ref, acc_ref, *, scale):
    k = pl.program_id(0)

    @pl.when(k == 0)
    def _():
        acc_ref[...] = jnp.zeros_like(acc_ref)

    f = f_ref[...]                                   # (C, TK), native dtype
    # F_tile @ F_tile.T without an explicit transpose: contract dim 1 of both.
    acc_ref[...] += lax.dot_general(
        f, f,
        dimension_numbers=(((1,), (1,)), ((), ())),
        preferred_element_type=jnp.float32,
    )

    @pl.when(k == pl.num_programs(0) - 1)
    def _():
        g_ref[...] = acc_ref[...] * scale


def _style_loss_kernel(f_ref, tgt_ref, loss_ref, acc_ref, *, scale, inv_n):
    k = pl.program_id(0)

    @pl.when(k == 0)
    def _():
        acc_ref[...] = jnp.zeros_like(acc_ref)

    f = f_ref[...]                                   # (C, TK), native dtype
    acc_ref[...] += lax.dot_general(
        f, f,
        dimension_numbers=(((1,), (1,)), ((), ())),
        preferred_element_type=jnp.float32,
    )

    @pl.when(k == pl.num_programs(0) - 1)
    def _():
        g = acc_ref[...] * scale                     # Gram(x), f32
        d = g - tgt_ref[...]
        loss_ref[0, 0] = jnp.sum(d * d) * inv_n      # MSE mean over C*C


# ---------------------------------------------------------------------------
# Wrappers
# ---------------------------------------------------------------------------
def gram_matrix_pallas(x, *, max_tk=2048):
    b, c, h, w = x.shape
    assert b == 1, "gram_matrix (torch .view(c, h*w)) assumes batch == 1"
    hw = h * w
    f = x.reshape(c, hw)                             # glue reshape (plain JAX)
    tk = _pick_tk(hw, max_tk)
    scale = 1.0 / float(c * hw)
    return pl.pallas_call(
        functools.partial(_gram_kernel, scale=scale),
        out_shape=jax.ShapeDtypeStruct((c, c), jnp.float32),
        grid=(hw // tk,),
        in_specs=[pl.BlockSpec((c, tk), lambda k: (0, k))],
        out_specs=pl.BlockSpec((c, c), lambda k: (0, 0)),
        scratch_shapes=[pltpu.VMEM((c, c), jnp.float32)],
        compiler_params=_COMPILER_PARAMS,
    )(f)


def style_loss_pallas(x, target_gram, *, max_tk=2048):
    b, c, h, w = x.shape
    assert b == 1
    hw = h * w
    f = x.reshape(c, hw)                             # glue reshape (plain JAX)
    tk = _pick_tk(hw, max_tk)
    scale = 1.0 / float(c * hw)
    inv_n = 1.0 / float(c * c)                       # MSE mean over c*c elems
    loss = pl.pallas_call(
        functools.partial(_style_loss_kernel, scale=scale, inv_n=inv_n),
        out_shape=jax.ShapeDtypeStruct((1, 1), jnp.float32),
        grid=(hw // tk,),
        in_specs=[
            pl.BlockSpec((c, tk), lambda k: (0, k)),   # streamed F tiles
            pl.BlockSpec((c, c), lambda k: (0, 0)),    # resident target Gram
        ],
        out_specs=pl.BlockSpec((1, 1), lambda k: (0, 0),
                               memory_space=pltpu.SMEM),
        scratch_shapes=[pltpu.VMEM((c, c), jnp.float32)],
        compiler_params=_COMPILER_PARAMS,
    )(f, target_gram)
    return loss[0, 0]


class StyleLoss:
    """Mirror of the PyTorch module: holds target Gram, forward returns x
    unchanged and stores self.loss."""

    def __init__(self, target):
        self.target = gram_matrix_pallas(target)     # detached target Gram
        self.loss = None

    def __call__(self, x):
        self.loss = style_loss_pallas(x, self.target)
        return x


# ---------------------------------------------------------------------------
# Main
# ---------------------------------------------------------------------------
if __name__ == "__main__":
    key = jax.random.PRNGKey(0)
    k_t, k_x = jax.random.split(key)

    # Small shapes consistent with the module: NCHW, batch must be 1.
    # H*W = 1024; we force max_tk=256 in the check below so the grid has
    # 4 reduction steps and the accumulate/finalize path is exercised.
    b, c, h, w = 1, 8, 32, 32
    target = jax.random.normal(k_t, (b, c, h, w), dtype=jnp.float32)
    x = jax.random.normal(k_x, (b, c, h, w), dtype=jnp.float32)

    # Build the module (default tiling), then recompute with explicit small
    # tiles to exercise the multi-step reduction as well.
    module = StyleLoss(target)
    out = module(x)
    loss = module.loss
    loss_tiled = style_loss_pallas(x, gram_matrix_pallas(target, max_tk=256),
                                   max_tk=256)
    jax.block_until_ready((out, loss, loss_tiled))

    # Pure-JAX reference check.
    def gram_ref(t):
        f = t.reshape(c, h * w)
        return (f @ f.T) / (c * h * w)

    g_ref = gram_ref(x)
    loss_ref = jnp.mean((g_ref - gram_ref(target)) ** 2)
    assert jnp.allclose(out, x), "forward must return x unchanged"
    assert jnp.allclose(loss, loss_ref, rtol=1e-5, atol=1e-6), (loss, loss_ref)
    assert jnp.allclose(loss_tiled, loss_ref, rtol=1e-5, atol=1e-6), (
        loss_tiled, loss_ref)

    print("KERNEL_OK")
</pallas_src>

<mosaic_0001>
module attributes {stable_mosaic.version = 11 : i64} {
  func.func @_gram_kernel(%arg0: i32, %arg1: memref<8x1024xf32, #tpu.memory_space<vmem>>, %arg2: memref<8x8xf32, #tpu.memory_space<vmem>>, %arg3: memref<8x8xf32, #tpu.memory_space<vmem>>) attributes {dimension_semantics = [#tpu.dimension_semantics<arbitrary>], iteration_bounds = array<i64: 1>, scalar_prefetch = 0 : i64, scratch_operands = 1 : i64, tpu.core_type = #tpu.core_type<tc>, window_params = [{transform_indices = @transform_0, window_bounds = array<i64: 8, 1024>}, {pipeline_mode = #tpu.pipeline_mode<synchronous>, transform_indices = @transform_1, window_bounds = array<i64: 8, 8>}]} {
    %c0_i32 = arith.constant 0 : i32
    %0 = arith.cmpi eq, %arg0, %c0_i32 : i32
    %1 = arith.extui %0 : i1 to i32
    %c0_i32_0 = arith.constant 0 : i32
    %2 = arith.cmpi ne, %1, %c0_i32_0 : i32
    scf.if %2 {
      %cst_8 = arith.constant 0.000000e+00 : f32
      %11 = vector.broadcast %cst_8 : f32 to vector<8x8xf32>
      %c0_9 = arith.constant 0 : index
      %c0_10 = arith.constant 0 : index
      %12 = vector.load %arg3[%c0_9, %c0_10] : memref<8x8xf32, #tpu.memory_space<vmem>>, vector<8x8xf32>
      tpu.vector_store %arg3[%c0_9, %c0_10], %11 {strides = array<i32>} : memref<8x8xf32, #tpu.memory_space<vmem>>, vector<8x8xf32>,
    } else {
    }
    %c0 = arith.constant 0 : index
    %c0_1 = arith.constant 0 : index
    %3 = vector.load %arg1[%c0, %c0_1] : memref<8x1024xf32, #tpu.memory_space<vmem>>, vector<8x1024xf32>
    %c0_2 = arith.constant 0 : index
    %c0_3 = arith.constant 0 : index
    %4 = vector.load %arg3[%c0_2, %c0_3] : memref<8x8xf32, #tpu.memory_space<vmem>>, vector<8x8xf32>
    %cst = arith.constant dense<0.000000e+00> : vector<8x8xf32>
    %5 = tpu.matmul %3, %3, %cst {dimension_numbers = #tpu.dot_dimension_numbers<[1], [1], [0], [0], [0, 0, 1, 0], [], []>} : vector<8x1024xf32>, vector<8x1024xf32>, vector<8x8xf32> -> vector<8x8xf32>
    %6 = arith.addf %4, %5 : vector<8x8xf32>
    %c0_4 = arith.constant 0 : index
    %c0_5 = arith.constant 0 : index
    %7 = vector.load %arg3[%c0_4, %c0_5] : memref<8x8xf32, #tpu.memory_space<vmem>>, vector<8x8xf32>
    tpu.vector_store %arg3[%c0_4, %c0_5], %6 {strides = array<i32>} : memref<8x8xf32, #tpu.memory_space<vmem>>, vector<8x8xf32>,
    %c0_i32_6 = arith.constant 0 : i32
    %8 = arith.cmpi eq, %arg0, %c0_i32_6 : i32
    %9 = arith.extui %8 : i1 to i32
    %c0_i32_7 = arith.constant 0 : i32
    %10 = arith.cmpi ne, %9, %c0_i32_7 : i32
    scf.if %10 {
      %c0_8 = arith.constant 0 : index
      %c0_9 = arith.constant 0 : index
      %11 = vector.load %arg3[%c0_8, %c0_9] : memref<8x8xf32, #tpu.memory_space<vmem>>, vector<8x8xf32>
      %cst_10 = arith.constant 1.22070313E-4 : f32
      %12 = vector.broadcast %cst_10 : f32 to vector<8x8xf32>
      %13 = arith.mulf %11, %12 : vector<8x8xf32>
      %c0_11 = arith.constant 0 : index
      %c0_12 = arith.constant 0 : index
      %14 = vector.load %arg2[%c0_11, %c0_12] : memref<8x8xf32, #tpu.memory_space<vmem>>, vector<8x8xf32>
      tpu.vector_store %arg2[%c0_11, %c0_12], %13 {strides = array<i32>} : memref<8x8xf32, #tpu.memory_space<vmem>>, vector<8x8xf32>,
    } else {
    }
    return
  }
  func.func @transform_0(%arg0: i32) -> (i32, i32) {
    %c0_i32 = arith.constant 0 : i32
    %c0_i32_0 = arith.constant 0 : i32
    return %c0_i32, %arg0 : i32, i32
  }
  func.func @transform_1(%arg0: i32) -> (i32, i32) {
    %c0_i32 = arith.constant 0 : i32
    %c0_i32_0 = arith.constant 0 : i32
    %c0_i32_1 = arith.constant 0 : i32
    return %c0_i32, %c0_i32_0 : i32, i32
  }
}

</mosaic_0001>

<llo_original>
// kernel: tpu_custom_call.1
$region0: #{tpu_custom_call.1}
  #allocation0 [shape = 'u32[]', space=smem, size = 0x4, offset = 0x4, fixed_abs, tag = 'smem constant byte address 0x4 - core index']
  #allocation1 [shape = 'u32[144,128]{1,0:T(1,128)}', space=vmem, size = 0x12000, scoped, tag = 'internal scratch']
  #allocation2 [shape = 'f32[8,8]{1,0:T(8,128)}', space=vmem, size = 0x1000, scoped, tag = 'scratch operand']
  %s0 = inlined_call_operand.hbm [shape: f32[8,1024], index: 0, kind: input, shape index: {}]
  %s1 = inlined_call_operand.hbm [shape: f32[8,8], index: 1, kind: output, shape index: {}]
  %s2 = sld [smem:[#allocation0]]
  $region26: #{tpu_custom_call.1} parent=0
    _
  %s4 = ssub.s32 1, %s2
  %s5 = scalar_select 0, %s4, %s2
  $region1: #{tpu_custom_call.1} parent=0
    #allocation3 [shape = 'u8[32768]{0}', space=vmem, size = 0x8000, scoped, tag = 'input window, operand 0, single buffered']
    #allocation4 [shape = 's32[1]{0}', space=sflag, size = 0x4, scoped, tag = 'scoped memory for tpu_custom_call.1']
    #allocation5 [shape = 's32[1]{0}', space=sflag, size = 0x4, scoped, tag = 'scoped memory for tpu_custom_call.1']
    #allocation6 [shape = 'u8[4096]{0}', space=vmem, size = 0x1000, scoped, tag = 'output window, operand 0, single buffered']
    %6 = vsyncpa [#allocation4], 0
    %7 = vsyncpa [#allocation5], 0
    // Predicated region
    $region2: #{tpu_custom_call.1} parent=1 // pred_check
      _
    $region3: #{tpu_custom_call.1} parent=1 // pred_check_branch
      %9 = sbr.rel (0) target = $region5
    $region4: #{tpu_custom_call.1} parent=1 // pred_region
      %s11 = ssub.s32 1024, 1024
      %12 = vsyncadd [#allocation4], %s11
      %s14 = sshll.u32 [#allocation3], 4
      %s15 = int_to_ptr.vmem [resolvable:$true] %s14
      %17 = dma.hbm_to_vmem [thread:$0]  %s0, 1024, %s15, [#allocation4]
    $region5: #{tpu_custom_call.1} parent=1 // pred_fallthru
      _
    // Predicated region
    $region6: #{tpu_custom_call.1} parent=1 // pred_check
      _
    $region7: #{tpu_custom_call.1} parent=1 // pred_check_branch
      %19 = sbr.rel (0) target = $region9
    $region8: #{tpu_custom_call.1} parent=1 // pred_region
      %20 = dma.done [#allocation4], 1024
    $region9: #{tpu_custom_call.1} parent=1 // pred_fallthru
      _
    %p21 = scmp.eq.s32.totalorder 0, 0
    // Predicated region
    $region10: #{tpu_custom_call.1} parent=1 // pred_check
      %p22 = pneg %p21
    $region11: #{tpu_custom_call.1} parent=1 // pred_check_branch
      %24 = sbr.rel (%p22) target = $region13
    $region12: #{tpu_custom_call.1} parent=1 // pred_region
      %vm25 = vcmask 64512
      %26 = vst.msk [vmem:[#allocation2] sm:$0xff] %vm25, 0.0
    $region13: #{tpu_custom_call.1} parent=1 // pred_fallthru
      _
    %v27 = vld [vmem:[#allocation3] sm:$0xff]
    %v28 = vld [vmem:[#allocation3 + $0x8] sm:$0xff]
    %v29 = vld [vmem:[#allocation3 + $0x10] sm:$0xff]
    %v30 = vld [vmem:[#allocation3 + $0x18] sm:$0xff]
    %v31 = vld [vmem:[#allocation3 + $0x20] sm:$0xff]
    %v32 = vld [vmem:[#allocation3 + $0x28] sm:$0xff]
    %v33 = vld [vmem:[#allocation3 + $0x30] sm:$0xff]
    %v34 = vld [vmem:[#allocation3 + $0x38] sm:$0xff]
    %v35 = vld [vmem:[#allocation2] sm:$0xff]
    %36 = vmatprep.subr.mxu0 %v28
    %37 = vmatpush1.xpose.msra.mxu0 %v27
    %38 = vmatprep.subr.mxu0 0.0
    %39 = vmatpush1.xpose.msra.mxu0 0.0
    %40 = vmatprep.subr.mxu0 0.0
    %41 = vmatpush1.xpose.msra.mxu0 0.0
    %42 = vmatprep.subr.mxu0 0.0
    %43 = vmatpush1.xpose.msra.mxu0 0.0
    %44 = vmatprep.subr.mxu0 0.0
    %45 = vmatpush1.xpose.msra.mxu0 0.0
    %46 = vmatprep.subr.mxu0 0.0
    %47 = vmatpush1.xpose.msra.mxu0 0.0
    %48 = vmatprep.subr.mxu0 0.0
    %49 = vmatpush1.xpose.msra.mxu0 0.0
    %50 = vmatprep.subr.mxu0 0.0
    %51 = vmatpush1.xpose.msra.mxu0 0.0
    %52 = vmatprep.subr.mxu0 0.0
    %53 = vmatpush1.xpose.msra.mxu0 0.0
    %54 = vmatprep.subr.mxu0 0.0
    %55 = vmatpush1.xpose.msra.mxu0 0.0
    %56 = vmatprep.subr.mxu0 0.0
    %57 = vmatpush1.xpose.msra.mxu0 0.0
    %58 = vmatprep.subr.mxu0 0.0
    %59 = vmatpush1.xpose.msra.mxu0 0.0
    %60 = vmatprep.subr.mxu0 0.0
    %61 = vmatpush1.xpose.msra.mxu0 0.0
    %62 = vmatprep.subr.mxu0 0.0
    %63 = vmatpush1.xpose.msra.mxu0 0.0
    %64 = vmatprep.subr.mxu0 0.0
    %65 = vmatpush1.xpose.msra.mxu0 0.0
    %66 = vmatprep.subr.mxu0 0.0
    %67 = vmatpush1.xpose.msra.mxu0 0.0
    %68 = vmatprep.subr.mxu0 0.0
    %69 = vmatpush1.xpose.msra.mxu0 0.0
    %70 = vmatprep.subr.mxu0 0.0
    %71 = vmatpush1.xpose.msra.mxu0 0.0
    %72 = vmatprep.subr.mxu0 0.0
    %73 = vmatpush1.xpose.msra.mxu0 0.0
    %74 = vmatprep.subr.mxu0 0.0
    %75 = vmatpush1.xpose.msra.mxu0 0.0
    %76 = vmatprep.subr.mxu0 0.0
    %77 = vmatpush1.xpose.msra.mxu0 0.0
    %78 = vmatprep.subr.mxu0 0.0
    %79 = vmatpush1.xpose.msra.mxu0 0.0
    %80 = vmatprep.subr.mxu0 0.0
    %81 = vmatpush1.xpose.msra.mxu0 0.0
    %82 = vmatprep.subr.mxu0 0.0
    %83 = vmatpush1.xpose.msra.mxu0 0.0
    %84 = vmatprep.subr.mxu0 0.0
    %85 = vmatpush1.xpose.msra.mxu0 0.0
    %86 = vmatprep.subr.mxu0 0.0
    %87 = vmatpush1.xpose.msra.mxu0 0.0
    %88 = vmatprep.subr.mxu0 0.0
    %89 = vmatpush1.xpose.msra.mxu0 0.0
    %90 = vmatprep.subr.mxu0 0.0
    %91 = vmatpush1.xpose.msra.mxu0 0.0
    %92 = vmatprep.subr.mxu0 0.0
    %93 = vmatpush1.xpose.msra.mxu0 0.0
    %94 = vmatprep.subr.mxu0 0.0
    %95 = vmatpush1.xpose.msra.mxu0 0.0
    %96 = vmatprep.subr.mxu0 0.0
    %97 = vmatpush1.xpose.msra.mxu0 0.0
    %98 = vmatprep.subr.mxu0 0.0
    %99 = vmatpush1.xpose.msra.mxu0 0.0
    %100 = vmatprep.mubr.f32.mxu0 %v28
    %101 = vmatmul.mubr.f32.gmra.mrb[0].mxu0 %v27
    %v102 = vpop.f32.mrb[0].mxu0
    %v103 = vadd.f32 0.0, %v102
    %v104 = vpop.f32.mrb[0].mxu0
    %105 = vdwg.mxu0
    %106 = vmatprep.subr.mxu0 %v30
    %107 = vmatpush1.xpose.msra.mxu0 %v29
    %108 = vmatprep.subr.mxu0 0.0
    %109 = vmatpush1.xpose.msra.mxu0 0.0
    %110 = vmatprep.subr.mxu0 0.0
    %111 = vmatpush1.xpose.msra.mxu0 0.0
    %112 = vmatprep.subr.mxu0 0.0
    %113 = vmatpush1.xpose.msra.mxu0 0.0
    %114 = vmatprep.subr.mxu0 0.0
    %115 = vmatpush1.xpose.msra.mxu0 0.0
    %116 = vmatprep.subr.mxu0 0.0
    %117 = vmatpush1.xpose.msra.mxu0 0.0
    %118 = vmatprep.subr.mxu0 0.0
    %119 = vmatpush1.xpose.msra.mxu0 0.0
    %120 = vmatprep.subr.mxu0 0.0
    %121 = vmatpush1.xpose.msra.mxu0 0.0
    %122 = vmatprep.subr.mxu0 0.0
    %123 = vmatpush1.xpose.msra.mxu0 0.0
    %124 = vmatprep.subr.mxu0 0.0
    %125 = vmatpush1.xpose.msra.mxu0 0.0
    %126 = vmatprep.subr.mxu0 0.0
    %127 = vmatpush1.xpose.msra.mxu0 0.0
    %128 = vmatprep.subr.mxu0 0.0
    %129 = vmatpush1.xpose.msra.mxu0 0.0
    %130 = vmatprep.subr.mxu0 0.0
    %131 = vmatpush1.xpose.msra.mxu0 0.0
    %132 = vmatprep.subr.mxu0 0.0
    %133 = vmatpush1.xpose.msra.mxu0 0.0
    %134 = vmatprep.subr.mxu0 0.0
    %135 = vmatpush1.xpose.msra.mxu0 0.0
    %136 = vmatprep.subr.mxu0 0.0
    %137 = vmatpush1.xpose.msra.mxu0 0.0
    %138 = vmatprep.subr.mxu0 0.0
    %139 = vmatpush1.xpose.msra.mxu0 0.0
    %140 = vmatprep.subr.mxu0 0.0
    %141 = vmatpush1.xpose.msra.mxu0 0.0
    %142 = vmatprep.subr.mxu0 0.0
    %143 = vmatpush1.xpose.msra.mxu0 0.0
    %144 = vmatprep.subr.mxu0 0.0
    %145 = vmatpush1.xpose.msra.mxu0 0.0
    %146 = vmatprep.subr.mxu0 0.0
    %147 = vmatpush1.xpose.msra.mxu0 0.0
    %148 = vmatprep.subr.mxu0 0.0
    %149 = vmatpush1.xpose.msra.mxu0 0.0
    %150 = vmatprep.subr.mxu0 0.0
    %151 = vmatpush1.xpose.msra.mxu0 0.0
    %152 = vmatprep.subr.mxu0 0.0
    %153 = vmatpush1.xpose.msra.mxu0 0.0
    %154 = vmatprep.subr.mxu0 0.0
    %155 = vmatpush1.xpose.msra.mxu0 0.0
    %156 = vmatprep.subr.mxu0 0.0
    %157 = vmatpush1.xpose.msra.mxu0 0.0
    %158 = vmatprep.subr.mxu0 0.0
    %159 = vmatpush1.xpose.msra.mxu0 0.0
    %160 = vmatprep.subr.mxu0 0.0
    %161 = vmatpush1.xpose.msra.mxu0 0.0
    %162 = vmatprep.subr.mxu0 0.0
    %163 = vmatpush1.xpose.msra.mxu0 0.0
    %164 = vmatprep.subr.mxu0 0.0
    %165 = vmatpush1.xpose.msra.mxu0 0.0
    %166 = vmatprep.subr.mxu0 0.0
    %167 = vmatpush1.xpose.msra.mxu0 0.0
    %168 = vmatprep.subr.mxu0 0.0
    %169 = vmatpush1.xpose.msra.mxu0 0.0
    %170 = vmatprep.mubr.f32.mxu0 %v30
    %171 = vmatmul.mubr.f32.gmra.mrb[0].mxu0 %v29
    %v172 = vpop.f32.mrb[0].mxu0
    %v173 = vadd.f32 %v103, %v172
    %v174 = vpop.f32.mrb[0].mxu0
    %175 = vdwg.mxu0
    %176 = vmatprep.subr.mxu0 %v32
    %177 = vmatpush1.xpose.msra.mxu0 %v31
    %178 = vmatprep.subr.mxu0 0.0
    %179 = vmatpush1.xpose.msra.mxu0 0.0
    %180 = vmatprep.subr.mxu0 0.0
    %181 = vmatpush1.xpose.msra.mxu0 0.0
    %182 = vmatprep.subr.mxu0 0.0
    %183 = vmatpush1.xpose.msra.mxu0 0.0
    %184 = vmatprep.subr.mxu0 0.0
    %185 = vmatpush1.xpose.msra.mxu0 0.0
    %186 = vmatprep.subr.mxu0 0.0
    %187 = vmatpush1.xpose.msra.mxu0 0.0
    %188 = vmatprep.subr.mxu0 0.0
    %189 = vmatpush1.xpose.msra.mxu0 0.0
    %190 = vmatprep.subr.mxu0 0.0
    %191 = vmatpush1.xpose.msra.mxu0 0.0
    %192 = vmatprep.subr.mxu0 0.0
    %193 = vmatpush1.xpose.msra.mxu0 0.0
    %194 = vmatprep.subr.mxu0 0.0
    %195 = vmatpush1.xpose.msra.mxu0 0.0
    %196 = vmatprep.subr.mxu0 0.0
    %197 = vmatpush1.xpose.msra.mxu0 0.0
    %198 = vmatprep.subr.mxu0 0.0
    %199 = vmatpush1.xpose.msra.mxu0 0.0
    %200 = vmatprep.subr.mxu0 0.0
    %201 = vmatpush1.xpose.msra.mxu0 0.0
    %202 = vmatprep.subr.mxu0 0.0
    %203 = vmatpush1.xpose.msra.mxu0 0.0
    %204 = vmatprep.subr.mxu0 0.0
    %205 = vmatpush1.xpose.msra.mxu0 0.0
    %206 = vmatprep.subr.mxu0 0.0
    %207 = vmatpush1.xpose.msra.mxu0 0.0
    %208 = vmatprep.subr.mxu0 0.0
    %209 = vmatpush1.xpose.msra.mxu0 0.0
    %210 = vmatprep.subr.mxu0 0.0
    %211 = vmatpush1.xpose.msra.mxu0 0.0
    %212 = vmatprep.subr.mxu0 0.0
    %213 = vmatpush1.xpose.msra.mxu0 0.0
    %214 = vmatprep.subr.mxu0 0.0
    %215 = vmatpush1.xpose.msra.mxu0 0.0
    %216 = vmatprep.subr.mxu0 0.0
    %217 = vmatpush1.xpose.msra.mxu0 0.0
    %218 = vmatprep.subr.mxu0 0.0
    %219 = vmatpush1.xpose.msra.mxu0 0.0
    %220 = vmatprep.subr.mxu0 0.0
    %221 = vmatpush1.xpose.msra.mxu0 0.0
    %222 = vmatprep.subr.mxu0 0.0
    %223 = vmatpush1.xpose.msra.mxu0 0.0
    %224 = vmatprep.subr.mxu0 0.0
    %225 = vmatpush1.xpose.msra.mxu0 0.0
    %226 = vmatprep.subr.mxu0 0.0
    %227 = vmatpush1.xpose.msra.mxu0 0.0
    %228 = vmatprep.subr.mxu0 0.0
    %229 = vmatpush1.xpose.msra.mxu0 0.0
    %230 = vmatprep.subr.mxu0 0.0
    %231 = vmatpush1.xpose.msra.mxu0 0.0
    %232 = vmatprep.subr.mxu0 0.0
    %233 = vmatpush1.xpose.msra.mxu0 0.0
    %234 = vmatprep.subr.mxu0 0.0
    %235 = vmatpush1.xpose.msra.mxu0 0.0
    %236 = vmatprep.subr.mxu0 0.0
    %237 = vmatpush1.xpose.msra.mxu0 0.0
    %238 = vmatprep.subr.mxu0 0.0
    %239 = vmatpush1.xpose.msra.mxu0 0.0
    %240 = vmatprep.mubr.f32.mxu0 %v32
    %241 = vmatmul.mubr.f32.gmra.mrb[0].mxu0 %v31
    %v242 = vpop.f32.mrb[0].mxu0
    %v243 = vadd.f32 %v173, %v242
    %v244 = vpop.f32.mrb[0].mxu0
    %245 = vdwg.mxu0
    %246 = vmatprep.subr.mxu0 %v34
    %247 = vmatpush1.xpose.msra.mxu0 %v33
    %248 = vmatprep.subr.mxu0 0.0
    %249 = vmatpush1.xpose.msra.mxu0 0.0
    %250 = vmatprep.subr.mxu0 0.0
    %251 = vmatpush1.xpose.msra.mxu0 0.0
    %252 = vmatprep.subr.mxu0 0.0
    %253 = vmatpush1.xpose.msra.mxu0 0.0
    %254 = vmatprep.subr.mxu0 0.0
    %255 = vmatpush1.xpose.msra.mxu0 0.0
    %256 = vmatprep.subr.mxu0 0.0
    %257 = vmatpush1.xpose.msra.mxu0 0.0
    %258 = vmatprep.subr.mxu0 0.0
    %259 = vmatpush1.xpose.msra.mxu0 0.0
    %260 = vmatprep.subr.mxu0 0.0
    %261 = vmatpush1.xpose.msra.mxu0 0.0
    %262 = vmatprep.subr.mxu0 0.0
    %263 = vmatpush1.xpose.msra.mxu0 0.0
    %264 = vmatprep.subr.mxu0 0.0
    %265 = vmatpush1.xpose.msra.mxu0 0.0
    %266 = vmatprep.subr.mxu0 0.0
    %267 = vmatpush1.xpose.msra.mxu0 0.0
    %268 = vmatprep.subr.mxu0 0.0
    %269 = vmatpush1.xpose.msra.mxu0 0.0
    %270 = vmatprep.subr.mxu0 0.0
    %271 = vmatpush1.xpose.msra.mxu0 0.0
    %272 = vmatprep.subr.mxu0 0.0
    %273 = vmatpush1.xpose.msra.mxu0 0.0
    %274 = vmatprep.subr.mxu0 0.0
    %275 = vmatpush1.xpose.msra.mxu0 0.0
    %276 = vmatprep.subr.mxu0 0.0
    %277 = vmatpush1.xpose.msra.mxu0 0.0
    %278 = vmatprep.subr.mxu0 0.0
    %279 = vmatpush1.xpose.msra.mxu0 0.0
    %280 = vmatprep.subr.mxu0 0.0
    %281 = vmatpush1.xpose.msra.mxu0 0.0
    %282 = vmatprep.subr.mxu0 0.0
    %283 = vmatpush1.xpose.msra.mxu0 0.0
    %284 = vmatprep.subr.mxu0 0.0
    %285 = vmatpush1.xpose.msra.mxu0 0.0
    %286 = vmatprep.subr.mxu0 0.0
    %287 = vmatpush1.xpose.msra.mxu0 0.0
    %288 = vmatprep.subr.mxu0 0.0
    %289 = vmatpush1.xpose.msra.mxu0 0.0
    %290 = vmatprep.subr.mxu0 0.0
    %291 = vmatpush1.xpose.msra.mxu0 0.0
    %292 = vmatprep.subr.mxu0 0.0
    %293 = vmatpush1.xpose.msra.mxu0 0.0
    %294 = vmatprep.subr.mxu0 0.0
    %295 = vmatpush1.xpose.msra.mxu0 0.0
    %296 = vmatprep.subr.mxu0 0.0
    %297 = vmatpush1.xpose.msra.mxu0 0.0
    %298 = vmatprep.subr.mxu0 0.0
    %299 = vmatpush1.xpose.msra.mxu0 0.0
    %300 = vmatprep.subr.mxu0 0.0
    %301 = vmatpush1.xpose.msra.mxu0 0.0
    %302 = vmatprep.subr.mxu0 0.0
    %303 = vmatpush1.xpose.msra.mxu0 0.0
    %304 = vmatprep.subr.mxu0 0.0
    %305 = vmatpush1.xpose.msra.mxu0 0.0
    %306 = vmatprep.subr.mxu0 0.0
    %307 = vmatpush1.xpose.msra.mxu0 0.0
    %308 = vmatprep.subr.mxu0 0.0
    %309 = vmatpush1.xpose.msra.mxu0 0.0
    %310 = vmatprep.mubr.f32.mxu0 %v34
    %311 = vmatmul.mubr.f32.gmra.mrb[0].mxu0 %v33
    %v312 = vpop.f32.mrb[0].mxu0
    %v313 = vadd.f32 %v243, %v312
    %v314 = vpop.f32.mrb[0].mxu0
    %315 = vdwg.mxu0
    %v316 = vadd.f32 %v35, %v313
    %vm317 = vcmask 64512
    %318 = vst.msk [vmem:[#allocation2] sm:$0xff] %vm317, %v316
    // Predicated region
    $region14: #{tpu_custom_call.1} parent=1 // pred_check
      %p319 = pneg %p21
    $region15: #{tpu_custom_call.1} parent=1 // pred_check_branch
      %321 = sbr.rel (%p319) target = $region17
    $region16: #{tpu_custom_call.1} parent=1 // pred_region
      %v322 = vld [vmem:[#allocation2] sm:$0xff]
      %v323 = vmul.f32 %v322, 0.00012207031
      %324 = vst.msk [vmem:[#allocation6] sm:$0xff] %vm317, %v323
    $region17: #{tpu_custom_call.1} parent=1 // pred_fallthru
      _
    // Predicated region
    $region18: #{tpu_custom_call.1} parent=1 // pred_check
      _
    $region19: #{tpu_custom_call.1} parent=1 // pred_check_branch
      %326 = sbr.rel (0) target = $region21
    $region20: #{tpu_custom_call.1} parent=1 // pred_region
      %s328 = ssub.s32 128, 128
      %329 = vsyncadd [#allocation5], %s328
      %s331 = sshll.u32 [#allocation6], 4
      %s332 = int_to_ptr.vmem [resolvable:$true] %s331
      %334 = dma.vmem_to_hbm [thread:$0]  %s332, 128, %s1, [#allocation5]
    $region21: #{tpu_custom_call.1} parent=1 // pred_fallthru
      _
    // Predicated region
    $region22: #{tpu_custom_call.1} parent=1 // pred_check
      _
    $region23: #{tpu_custom_call.1} parent=1 // pred_check_branch
      %336 = sbr.rel (0) target = $region25
    $region24: #{tpu_custom_call.1} parent=1 // pred_region
      %337 = dma.done [#allocation5], 128
    $region25: #{tpu_custom_call.1} parent=1 // pred_fallthru
      _
    %338 = vsyncpa [#allocation4], 1
    %339 = vsyncpa [#allocation5], 1

</llo_original>
